<compile_context>
chip_gen: v7x
topology: tpu7x:2x2x1
jax: 0.10.0
libtpu: 0.0.40
codegen_flags: <defaults>
</compile_context>

<pallas_src>
import functools

import jax
import jax.numpy as jnp
from jax import lax
from jax.experimental import pallas as pl
from jax.experimental.pallas import tpu as pltpu


def _cdiv(a: int, b: int) -> int:
    return -(-a // b)


def _round_up(x: int, m: int) -> int:
    return ((x + m - 1) // m) * m


def _sae_loss_kernel(recon_ref, orig_ref, lat_ref,
                     mse_part_ref, sparse_part_ref,
                     mse_acc, sparse_acc,
                     *, batch: int, block_b: int, steps_per_split: int):
    c = pl.program_id(0)            # batch split ("parallel" -> per-TC on v7x)
    i = pl.program_id(1)            # batch-tile step within split ("arbitrary")
    s = c * steps_per_split + i     # global (unclamped) batch-tile index

    @pl.when(i == 0)
    def _init():
        mse_acc[...] = jnp.zeros_like(mse_acc)
        sparse_acc[...] = jnp.zeros_like(sparse_acc)

    # Stream tiles in native dtype; compute in f32.
    recon = recon_ref[...].astype(jnp.float32)     # [TB, D]
    orig = orig_ref[...].astype(jnp.float32)       # [TB, D]
    lat = lat_ref[...].astype(jnp.float32)         # [TB, L]

    diff = recon - orig
    mse_row = jnp.sum(diff * diff, axis=-1, keepdims=True)        # [TB, 1]
    l1_row = jnp.sum(jnp.abs(lat), axis=-1, keepdims=True)        # [TB, 1]
    normsq_row = jnp.sum(orig * orig, axis=-1, keepdims=True)     # [TB, 1]

    # Full tiles take the cheap unmasked path; only the partial last tile
    # (and the clamped duplicate tail tiles of an uneven split) pay for the
    # iota/where masking.
    tile_full = (s + 1) * block_b <= batch

    @pl.when(tile_full)
    def _full():
        mse_acc[...] += mse_row
        sparse_acc[...] += l1_row * lax.rsqrt(normsq_row)

    @pl.when(jnp.logical_not(tile_full))
    def _masked():
        row = lax.broadcasted_iota(jnp.int32, (block_b, 1), 0) + s * block_b
        valid = row < batch
        # Overhang rows contain unspecified values -> mask BOTH terms.
        mse_acc[...] += jnp.where(valid, mse_row, jnp.float32(0.0))
        inv_norm = lax.rsqrt(jnp.where(valid, normsq_row, jnp.float32(1.0)))
        sparse_acc[...] += jnp.where(valid, l1_row * inv_norm, jnp.float32(0.0))

    @pl.when(i == pl.num_programs(1) - 1)
    def _finalize():
        # Per-split partial sums; cross-split combine + divides happen in the
        # wrapper.  Broadcast into the lane-aligned (1,8,128) output block.
        mse_part_ref[...] = (jnp.zeros(mse_part_ref.shape, jnp.float32)
                             + jnp.sum(mse_acc[...]))
        sparse_part_ref[...] = (jnp.zeros(sparse_part_ref.shape, jnp.float32)
                                + jnp.sum(sparse_acc[...]))


def sae_loss(reconstruction, original_input, latent_activations,
             sparse_weight: float = 0.0, block_b=None, num_splits=None):
    B, D = reconstruction.shape
    B2, L = latent_activations.shape
    assert B2 == B and original_input.shape == (B, D)

    isz = [jnp.dtype(x.dtype).itemsize
           for x in (reconstruction, original_input, latent_activations)]
    # Sublane alignment: 8 rows for 32-bit, 16 for bf16, 32 for 8-bit dtypes.
    row_align = max(8, 32 // min(isz))

    try:
        vmem_cap = int(pltpu.get_tpu_info().vmem_capacity_bytes)
    except Exception:
        vmem_cap = 64 * 1024 * 1024    # conservative (v7x per-TC VMEM)

    bytes_per_row = D * isz[0] + D * isz[1] + L * isz[2]

    # Batch-tile sizing: target ~8 MiB streamed per grid step (past the HBM
    # roofline plateau), capped so the double-buffered streaming footprint
    # stays within ~1/4 of physical VMEM (<=16 MiB on 64 MiB v7x parts,
    # <=24 MiB on 128 MiB v5e/v6e parts).
    # TODO(synk): chunk n_latents with a second "arbitrary" grid axis for very
    #             wide SAEs where even a row_align-tall tile blows the budget.
    if block_b is None:
        target_step_bytes = 8 << 20
        stream_budget = min(vmem_cap // 4, 24 << 20)
        block_b = min(target_step_bytes // max(bytes_per_row, 1),
                      stream_budget // max(2 * bytes_per_row, 1),
                      _round_up(B, row_align))
    block_b = max(row_align, (int(block_b) // row_align) * row_align)

    num_steps = _cdiv(B, block_b)

    # Leading "parallel" axis: sharded across TensorCores on v7x (2 TCs),
    # harmless serialization on single-TC v5e/v6e.
    if num_splits is None:
        num_splits = 2 if num_steps >= 2 else 1
    num_splits = max(1, min(int(num_splits), num_steps))
    steps_per_split = _cdiv(num_steps, num_splits)

    def row_map(c, i):
        s = c * steps_per_split + i
        # Clamp the duplicate tail steps of an uneven split to the last valid
        # batch tile; the kernel masks their rows (global row >= B) to zero.
        return (jnp.minimum(s, num_steps - 1), 0)

    # Explicit scoped-VMEM limit: double-buffered tiles + lane-padded
    # accumulators + margin for Mosaic internal scratch / outputs.
    acc_bytes = 2 * block_b * 128 * 4
    needed = 2 * block_b * bytes_per_row + acc_bytes + (6 << 20)
    vmem_limit = int(min(vmem_cap, max(needed, 16 << 20)))

    kernel = functools.partial(
        _sae_loss_kernel,
        batch=int(B), block_b=int(block_b), steps_per_split=int(steps_per_split))

    cost = pl.CostEstimate(
        flops=int(5 * B * D + 3 * B * L),
        transcendentals=int(B),
        bytes_accessed=int(B * D * (isz[0] + isz[1]) + B * L * isz[2]),
    )

    part_shape = jax.ShapeDtypeStruct((num_splits, 8, 128), jnp.float32)
    mse_part, sparse_part = pl.pallas_call(
        kernel,
        out_shape=(part_shape, part_shape),
        grid_spec=pltpu.PrefetchScalarGridSpec(
            num_scalar_prefetch=0,
            grid=(num_splits, steps_per_split),
            in_specs=[
                pl.BlockSpec((block_b, D), row_map),
                pl.BlockSpec((block_b, D), row_map),
                pl.BlockSpec((block_b, L), row_map),
            ],
            out_specs=[
                pl.BlockSpec((1, 8, 128), lambda c, i: (c, 0, 0)),
                pl.BlockSpec((1, 8, 128), lambda c, i: (c, 0, 0)),
            ],
            scratch_shapes=[
                pltpu.VMEM((block_b, 1), jnp.float32),   # per-row sum(diff^2)
                pltpu.VMEM((block_b, 1), jnp.float32),   # per-row l1/||x||
            ],
        ),
        compiler_params=pltpu.CompilerParams(
            dimension_semantics=("parallel", "arbitrary"),
            vmem_limit_bytes=vmem_limit,
        ),
        cost_estimate=cost,
    )(reconstruction, original_input, latent_activations)

    mse = jnp.sum(mse_part[:, 0, 0]) / jnp.float32(B * D)
    sparse = jnp.sum(sparse_part[:, 0, 0]) / jnp.float32(B)
    total = mse + jnp.float32(sparse_weight) * sparse
    return total, mse, sparse


def sae_loss_ref(reconstruction, original_input, latent_activations,
                 sparse_weight: float = 0.0):
    """Pure-JAX reference matching the PyTorch module (mse + normalized L1)."""
    recon = reconstruction.astype(jnp.float32)
    orig = original_input.astype(jnp.float32)
    lat = latent_activations.astype(jnp.float32)
    mse = jnp.mean((recon - orig) ** 2)
    sparse = jnp.mean(jnp.sum(jnp.abs(lat), axis=-1)
                      / jnp.linalg.norm(orig, axis=-1))
    return mse + sparse_weight * sparse, mse, sparse


if __name__ == "__main__":
    key = jax.random.PRNGKey(0)
    k1, k2, k3 = jax.random.split(key, 3)

    # Small shapes; B=20 with block_b=8 forces 3 batch tiles -> a 2-way split
    # with a clamped duplicate tail tile and a partial (masked) last tile, so
    # every accumulation / masking / finalize path is exercised.
    B, n_inputs, n_latents = 20, 128, 256
    sparse_weight = 0.5

    original_input = jax.random.normal(k1, (B, n_inputs), dtype=jnp.float32)
    reconstruction = original_input + 0.1 * jax.random.normal(
        k2, (B, n_inputs), dtype=jnp.float32)
    # ReLU-like sparse latents (as produced by Autoencoder.encode)
    latent_activations = jnp.maximum(
        jax.random.normal(k3, (B, n_latents), dtype=jnp.float32) - 1.0, 0.0)

    total, recon_l, sparse_l = sae_loss(
        reconstruction, original_input, latent_activations,
        sparse_weight=sparse_weight, block_b=8)
    jax.block_until_ready((total, recon_l, sparse_l))

    total_r, recon_r, sparse_r = sae_loss_ref(
        reconstruction, original_input, latent_activations,
        sparse_weight=sparse_weight)

    assert jnp.allclose(total, total_r, rtol=1e-5, atol=1e-6), (total, total_r)
    assert jnp.allclose(recon_l, recon_r, rtol=1e-5, atol=1e-6), (recon_l, recon_r)
    assert jnp.allclose(sparse_l, sparse_r, rtol=1e-5, atol=1e-6), (sparse_l, sparse_r)

    # Also check the auto-sized single-tile path (no masking, one split).
    total2, recon2, sparse2 = sae_loss(
        reconstruction, original_input, latent_activations,
        sparse_weight=sparse_weight)
    jax.block_until_ready((total2, recon2, sparse2))
    assert jnp.allclose(total2, total_r, rtol=1e-5, atol=1e-6), (total2, total_r)
    assert jnp.allclose(recon2, recon_r, rtol=1e-5, atol=1e-6), (recon2, recon_r)
    assert jnp.allclose(sparse2, sparse_r, rtol=1e-5, atol=1e-6), (sparse2, sparse_r)

    print("KERNEL_OK")
</pallas_src>

<mosaic_0001>
module attributes {stable_mosaic.version = 11 : i64} {
  func.func @_sae_loss_kernel(%arg0: i32, %arg1: i32, %arg2: memref<8x128xf32, #tpu.memory_space<vmem>>, %arg3: memref<8x128xf32, #tpu.memory_space<vmem>>, %arg4: memref<8x256xf32, #tpu.memory_space<vmem>>, %arg5: memref<1x8x128xf32, #tpu.memory_space<vmem>>, %arg6: memref<1x8x128xf32, #tpu.memory_space<vmem>>, %arg7: memref<8x1xf32, #tpu.memory_space<vmem>>, %arg8: memref<8x1xf32, #tpu.memory_space<vmem>>) attributes {dimension_semantics = [#tpu.dimension_semantics<parallel>, #tpu.dimension_semantics<arbitrary>], iteration_bounds = array<i64: 2, 2>, scalar_prefetch = 0 : i64, scratch_operands = 2 : i64, tpu.core_type = #tpu.core_type<tc>, window_params = [{transform_indices = @transform_0, window_bounds = array<i64: 8, 128>}, {transform_indices = @transform_1, window_bounds = array<i64: 8, 128>}, {transform_indices = @transform_2, window_bounds = array<i64: 8, 256>}, {transform_indices = @transform_3, window_bounds = array<i64: 1, 8, 128>}, {transform_indices = @transform_4, window_bounds = array<i64: 1, 8, 128>}]} {
    %c2_i32 = arith.constant 2 : i32
    %0 = arith.muli %arg0, %c2_i32 : i32
    %1 = arith.addi %0, %arg1 : i32
    %c0_i32 = arith.constant 0 : i32
    %2 = arith.cmpi eq, %arg1, %c0_i32 : i32
    %3 = arith.extui %2 : i1 to i32
    %c0_i32_0 = arith.constant 0 : i32
    %4 = arith.cmpi ne, %3, %c0_i32_0 : i32
    scf.if %4 {
      %cst_12 = arith.constant 0.000000e+00 : f32
      %29 = vector.broadcast %cst_12 : f32 to vector<8x1xf32>
      %c0_13 = arith.constant 0 : index
      %c0_14 = arith.constant 0 : index
      %30 = vector.load %arg7[%c0_13, %c0_14] : memref<8x1xf32, #tpu.memory_space<vmem>>, vector<8x1xf32>
      tpu.vector_store %arg7[%c0_13, %c0_14], %29 {strides = array<i32>} : memref<8x1xf32, #tpu.memory_space<vmem>>, vector<8x1xf32>,
      %cst_15 = arith.constant 0.000000e+00 : f32
      %31 = vector.broadcast %cst_15 : f32 to vector<8x1xf32>
      %c0_16 = arith.constant 0 : index
      %c0_17 = arith.constant 0 : index
      %32 = vector.load %arg8[%c0_16, %c0_17] : memref<8x1xf32, #tpu.memory_space<vmem>>, vector<8x1xf32>
      tpu.vector_store %arg8[%c0_16, %c0_17], %31 {strides = array<i32>} : memref<8x1xf32, #tpu.memory_space<vmem>>, vector<8x1xf32>,
    } else {
    }
    %c0 = arith.constant 0 : index
    %c0_1 = arith.constant 0 : index
    %5 = vector.load %arg2[%c0, %c0_1] : memref<8x128xf32, #tpu.memory_space<vmem>>, vector<8x128xf32>
    %c0_2 = arith.constant 0 : index
    %c0_3 = arith.constant 0 : index
    %6 = vector.load %arg3[%c0_2, %c0_3] : memref<8x128xf32, #tpu.memory_space<vmem>>, vector<8x128xf32>
    %c0_4 = arith.constant 0 : index
    %c0_5 = arith.constant 0 : index
    %7 = vector.load %arg4[%c0_4, %c0_5] : memref<8x256xf32, #tpu.memory_space<vmem>>, vector<8x256xf32>
    %8 = arith.subf %5, %6 : vector<8x128xf32>
    %9 = arith.mulf %8, %8 : vector<8x128xf32>
    %cst = arith.constant dense<0.000000e+00> : vector<8xf32>
    %10 = vector.multi_reduction <add>, %9, %cst [1] : vector<8x128xf32> to vector<8xf32>
    %11 = vector.shape_cast %10 : vector<8xf32> to vector<8x1xf32>
    %12 = math.absf %7 : vector<8x256xf32>
    %cst_6 = arith.constant dense<0.000000e+00> : vector<8xf32>
    %13 = vector.multi_reduction <add>, %12, %cst_6 [1] : vector<8x256xf32> to vector<8xf32>
    %14 = vector.shape_cast %13 : vector<8xf32> to vector<8x1xf32>
    %15 = arith.mulf %6, %6 : vector<8x128xf32>
    %cst_7 = arith.constant dense<0.000000e+00> : vector<8xf32>
    %16 = vector.multi_reduction <add>, %15, %cst_7 [1] : vector<8x128xf32> to vector<8xf32>
    %17 = vector.shape_cast %16 : vector<8xf32> to vector<8x1xf32>
    %c1_i32 = arith.constant 1 : i32
    %18 = arith.addi %1, %c1_i32 : i32
    %c8_i32 = arith.constant 8 : i32
    %19 = arith.muli %18, %c8_i32 : i32
    %c20_i32 = arith.constant 20 : i32
    %20 = arith.cmpi sle, %19, %c20_i32 : i32
    %21 = arith.extui %20 : i1 to i32
    %c0_i32_8 = arith.constant 0 : i32
    %22 = arith.cmpi ne, %21, %c0_i32_8 : i32
    scf.if %22 {
      %c0_12 = arith.constant 0 : index
      %c0_13 = arith.constant 0 : index
      %29 = vector.load %arg7[%c0_12, %c0_13] : memref<8x1xf32, #tpu.memory_space<vmem>>, vector<8x1xf32>
      %30 = arith.addf %29, %11 : vector<8x1xf32>
      %c0_14 = arith.constant 0 : index
      %c0_15 = arith.constant 0 : index
      %31 = vector.load %arg7[%c0_14, %c0_15] : memref<8x1xf32, #tpu.memory_space<vmem>>, vector<8x1xf32>
      tpu.vector_store %arg7[%c0_14, %c0_15], %30 {strides = array<i32>} : memref<8x1xf32, #tpu.memory_space<vmem>>, vector<8x1xf32>,
      %c0_16 = arith.constant 0 : index
      %c0_17 = arith.constant 0 : index
      %32 = vector.load %arg8[%c0_16, %c0_17] : memref<8x1xf32, #tpu.memory_space<vmem>>, vector<8x1xf32>
      %33 = math.rsqrt %17 : vector<8x1xf32>
      %34 = arith.mulf %14, %33 : vector<8x1xf32>
      %35 = arith.addf %32, %34 : vector<8x1xf32>
      %c0_18 = arith.constant 0 : index
      %c0_19 = arith.constant 0 : index
      %36 = vector.load %arg8[%c0_18, %c0_19] : memref<8x1xf32, #tpu.memory_space<vmem>>, vector<8x1xf32>
      tpu.vector_store %arg8[%c0_18, %c0_19], %35 {strides = array<i32>} : memref<8x1xf32, #tpu.memory_space<vmem>>, vector<8x1xf32>,
    } else {
    }
    %true = arith.constant true
    %23 = arith.xori %20, %true : i1
    %24 = arith.extui %23 : i1 to i32
    %c0_i32_9 = arith.constant 0 : i32
    %25 = arith.cmpi ne, %24, %c0_i32_9 : i32
    scf.if %25 {
      %29 = tpu.iota {dimensions = array<i32: 0>} : vector<8x1xi32>
      %c8_i32_12 = arith.constant 8 : i32
      %30 = arith.muli %1, %c8_i32_12 : i32
      %31 = vector.broadcast %30 : i32 to vector<8x1xi32>
      %32 = arith.addi %29, %31 : vector<8x1xi32>
      %c20_i32_13 = arith.constant 20 : i32
      %33 = vector.broadcast %c20_i32_13 : i32 to vector<8x1xi32>
      %34 = arith.cmpi slt, %32, %33 : vector<8x1xi32>
      %c0_14 = arith.constant 0 : index
      %c0_15 = arith.constant 0 : index
      %35 = vector.load %arg7[%c0_14, %c0_15] : memref<8x1xf32, #tpu.memory_space<vmem>>, vector<8x1xf32>
      %cst_16 = arith.constant 0.000000e+00 : f32
      %36 = vector.broadcast %cst_16 : f32 to vector<8x1xf32>
      %37 = arith.select %34, %11, %36 : vector<8x1xi1>, vector<8x1xf32>
      %38 = arith.addf %35, %37 : vector<8x1xf32>
      %c0_17 = arith.constant 0 : index
      %c0_18 = arith.constant 0 : index
      %39 = vector.load %arg7[%c0_17, %c0_18] : memref<8x1xf32, #tpu.memory_space<vmem>>, vector<8x1xf32>
      tpu.vector_store %arg7[%c0_17, %c0_18], %38 {strides = array<i32>} : memref<8x1xf32, #tpu.memory_space<vmem>>, vector<8x1xf32>,
      %cst_19 = arith.constant 1.000000e+00 : f32
      %40 = vector.broadcast %cst_19 : f32 to vector<8x1xf32>
      %41 = arith.select %34, %17, %40 : vector<8x1xi1>, vector<8x1xf32>
      %42 = math.rsqrt %41 : vector<8x1xf32>
      %c0_20 = arith.constant 0 : index
      %c0_21 = arith.constant 0 : index
      %43 = vector.load %arg8[%c0_20, %c0_21] : memref<8x1xf32, #tpu.memory_space<vmem>>, vector<8x1xf32>
      %44 = arith.mulf %14, %42 : vector<8x1xf32>
      %cst_22 = arith.constant 0.000000e+00 : f32
      %45 = vector.broadcast %cst_22 : f32 to vector<8x1xf32>
      %46 = arith.select %34, %44, %45 : vector<8x1xi1>, vector<8x1xf32>
      %47 = arith.addf %43, %46 : vector<8x1xf32>
      %c0_23 = arith.constant 0 : index
      %c0_24 = arith.constant 0 : index
      %48 = vector.load %arg8[%c0_23, %c0_24] : memref<8x1xf32, #tpu.memory_space<vmem>>, vector<8x1xf32>
      tpu.vector_store %arg8[%c0_23, %c0_24], %47 {strides = array<i32>} : memref<8x1xf32, #tpu.memory_space<vmem>>, vector<8x1xf32>,
    } else {
    }
    %c1_i32_10 = arith.constant 1 : i32
    %26 = arith.cmpi eq, %arg1, %c1_i32_10 : i32
    %27 = arith.extui %26 : i1 to i32
    %c0_i32_11 = arith.constant 0 : i32
    %28 = arith.cmpi ne, %27, %c0_i32_11 : i32
    scf.if %28 {
      %cst_12 = arith.constant 0.000000e+00 : f32
      %29 = vector.broadcast %cst_12 : f32 to vector<1x8x128xf32>
      %c0_13 = arith.constant 0 : index
      %c0_14 = arith.constant 0 : index
      %30 = vector.load %arg7[%c0_13, %c0_14] : memref<8x1xf32, #tpu.memory_space<vmem>>, vector<8x1xf32>
      %31 = vector.shape_cast %30 : vector<8x1xf32> to vector<1x8x1xf32>
      %cst_15 = arith.constant dense<0.000000e+00> : vector<1xf32>
      %32 = vector.multi_reduction <add>, %31, %cst_15 [1, 2] : vector<1x8x1xf32> to vector<1xf32>
      %33 = vector.shape_cast %32 : vector<1xf32> to vector<1x1x1xf32>
      %34 = vector.extract %33[0, 0, 0] : f32 from vector<1x1x1xf32>
      %35 = vector.broadcast %34 : f32 to vector<1x8x128xf32>
      %36 = arith.addf %29, %35 : vector<1x8x128xf32>
      %c0_16 = arith.constant 0 : index
      %c0_17 = arith.constant 0 : index
      %c0_18 = arith.constant 0 : index
      %37 = vector.load %arg5[%c0_16, %c0_17, %c0_18] : memref<1x8x128xf32, #tpu.memory_space<vmem>>, vector<1x8x128xf32>
      tpu.vector_store %arg5[%c0_16, %c0_17, %c0_18], %36 {strides = array<i32>} : memref<1x8x128xf32, #tpu.memory_space<vmem>>, vector<1x8x128xf32>,
      %cst_19 = arith.constant 0.000000e+00 : f32
      %38 = vector.broadcast %cst_19 : f32 to vector<1x8x128xf32>
      %c0_20 = arith.constant 0 : index
      %c0_21 = arith.constant 0 : index
      %39 = vector.load %arg8[%c0_20, %c0_21] : memref<8x1xf32, #tpu.memory_space<vmem>>, vector<8x1xf32>
      %40 = vector.shape_cast %39 : vector<8x1xf32> to vector<1x8x1xf32>
      %cst_22 = arith.constant dense<0.000000e+00> : vector<1xf32>
      %41 = vector.multi_reduction <add>, %40, %cst_22 [1, 2] : vector<1x8x1xf32> to vector<1xf32>
      %42 = vector.shape_cast %41 : vector<1xf32> to vector<1x1x1xf32>
      %43 = vector.extract %42[0, 0, 0] : f32 from vector<1x1x1xf32>
      %44 = vector.broadcast %43 : f32 to vector<1x8x128xf32>
      %45 = arith.addf %38, %44 : vector<1x8x128xf32>
      %c0_23 = arith.constant 0 : index
      %c0_24 = arith.constant 0 : index
      %c0_25 = arith.constant 0 : index
      %46 = vector.load %arg6[%c0_23, %c0_24, %c0_25] : memref<1x8x128xf32, #tpu.memory_space<vmem>>, vector<1x8x128xf32>
      tpu.vector_store %arg6[%c0_23, %c0_24, %c0_25], %45 {strides = array<i32>} : memref<1x8x128xf32, #tpu.memory_space<vmem>>, vector<1x8x128xf32>,
    } else {
    }
    return
  }
  func.func @transform_0(%arg0: i32, %arg1: i32) -> (i32, i32) {
    %c2_i32 = arith.constant 2 : i32
    %0 = arith.muli %arg0, %c2_i32 : i32
    %1 = arith.addi %0, %arg1 : i32
    %c2_i32_0 = arith.constant 2 : i32
    %2 = arith.minsi %1, %c2_i32_0 : i32
    %c0_i32 = arith.constant 0 : i32
    %c0_i32_1 = arith.constant 0 : i32
    return %2, %c0_i32 : i32, i32
  }
  func.func @transform_1(%arg0: i32, %arg1: i32) -> (i32, i32) {
    %c2_i32 = arith.constant 2 : i32
    %0 = arith.muli %arg0, %c2_i32 : i32
    %1 = arith.addi %0, %arg1 : i32
    %c2_i32_0 = arith.constant 2 : i32
    %2 = arith.minsi %1, %c2_i32_0 : i32
    %c0_i32 = arith.constant 0 : i32
    %c0_i32_1 = arith.constant 0 : i32
    return %2, %c0_i32 : i32, i32
  }
  func.func @transform_2(%arg0: i32, %arg1: i32) -> (i32, i32) {
    %c2_i32 = arith.constant 2 : i32
    %0 = arith.muli %arg0, %c2_i32 : i32
    %1 = arith.addi %0, %arg1 : i32
    %c2_i32_0 = arith.constant 2 : i32
    %2 = arith.minsi %1, %c2_i32_0 : i32
    %c0_i32 = arith.constant 0 : i32
    %c0_i32_1 = arith.constant 0 : i32
    return %2, %c0_i32 : i32, i32
  }
  func.func @transform_3(%arg0: i32, %arg1: i32) -> (i32, i32, i32) {
    %c0_i32 = arith.constant 0 : i32
    %c0_i32_0 = arith.constant 0 : i32
    %c0_i32_1 = arith.constant 0 : i32
    return %arg0, %c0_i32, %c0_i32_0 : i32, i32, i32
  }
  func.func @transform_4(%arg0: i32, %arg1: i32) -> (i32, i32, i32) {
    %c0_i32 = arith.constant 0 : i32
    %c0_i32_0 = arith.constant 0 : i32
    %c0_i32_1 = arith.constant 0 : i32
    return %arg0, %c0_i32, %c0_i32_0 : i32, i32, i32
  }
}

</mosaic_0001>

<llo_original>
// kernel: tpu_custom_call.1
$region0: #{tpu_custom_call.1}
  #allocation0 [shape = 'u32[]', space=smem, size = 0x4, offset = 0x4, fixed_abs, tag = 'smem constant byte address 0x4 - core index']
  #allocation1 [shape = 'u32[144,128]{1,0:T(1,128)}', space=vmem, size = 0x12000, scoped, tag = 'internal scratch']
  #allocation2 [shape = 'f32[8,1]{1,0:T(8,128)}', space=vmem, size = 0x1000, scoped, tag = 'scratch operand']
  #allocation3 [shape = 'f32[8,1]{1,0:T(8,128)}', space=vmem, size = 0x1000, scoped, tag = 'scratch operand']
  %s0 = inlined_call_operand.hbm [shape: f32[20,128], index: 0, kind: input, shape index: {}]
  %s1 = inlined_call_operand.hbm [shape: f32[20,128], index: 1, kind: input, shape index: {}]
  %s2 = inlined_call_operand.hbm [shape: f32[20,256], index: 2, kind: input, shape index: {}]
  %s3 = inlined_call_operand.hbm [shape: f32[2,8,128], index: 3, kind: output, shape index: {0}]
  %s4 = inlined_call_operand.hbm [shape: f32[2,8,128], index: 4, kind: output, shape index: {1}]
  %5 = xla_tuple %s3, %s4
  %s6 = sld [smem:[#allocation0]]
  $region81: #{tpu_custom_call.1} parent=0
    _
  %s8 = ssub.s32 1, %s6
  %s9 = scalar_select 0, %s8, %s6
  $region1: #{tpu_custom_call.1} parent=0
    #allocation4 [shape = 'u8[8192]{0}', space=vmem, size = 0x2000, scoped, tag = 'input window, operand 0']
    #allocation5 [shape = 's32[2]{0}', space=sflag, size = 0x8, scoped, tag = 'scoped memory for tpu_custom_call.1']
    #allocation6 [shape = 's32[2]{0}', space=sflag, size = 0x8, scoped, tag = 'scoped memory for tpu_custom_call.1']
    #allocation7 [shape = 'u8[8192]{0}', space=vmem, size = 0x2000, scoped, tag = 'input window, operand 1']
    #allocation8 [shape = 's32[2]{0}', space=sflag, size = 0x8, scoped, tag = 'scoped memory for tpu_custom_call.1']
    #allocation9 [shape = 'u8[16384]{0}', space=vmem, size = 0x4000, scoped, tag = 'input window, operand 2']
    #allocation10 [shape = 'u8[8192]{0}', space=vmem, size = 0x2000, scoped, tag = 'output window, operand 0']
    #allocation11 [shape = 'u8[8192]{0}', space=vmem, size = 0x2000, scoped, tag = 'output window, operand 1']
    #allocation12 [shape = 's32[2]{0}', space=sflag, size = 0x8, scoped, tag = 'scoped memory for tpu_custom_call.1']
    %10 = vsyncpa [#allocation5], 0
    %s11 = scalar_lea.sflag [#allocation5], 1
    %12 = vsyncpa %s11, 0
    %13 = vsyncpa [#allocation8], 0
    %s14 = scalar_lea.sflag [#allocation8], 1
    %15 = vsyncpa %s14, 0
    %16 = vsyncpa [#allocation6], 0
    %s17 = scalar_lea.sflag [#allocation6], 1
    %18 = vsyncpa %s17, 0
    %19 = vsyncpa [#allocation12], 0
    %s20 = scalar_lea.sflag [#allocation12], 1
    %21 = vsyncpa %s20, 0
    loop: start=0, step=1, limit=6
    $region2: #{tpu_custom_call.1} parent=1 // loop_pre_header
      _
    $region3: #{tpu_custom_call.1} parent=1 // loop_header
      %s23 = sphi 0, %s27
      %p24 = scmp.ge.s32.totalorder %s23, 6
      %s30 = sphi 0, %s42
      %s31 = sphi 0, %s38
      %s32 = sphi 0, %s30
      %s33 = sphi 0, %s31
      %s34 = sphi 0, %s32
      %s35 = sphi 0, %s33
      %s53 = sphi 0, %s55
      %s56 = sphi 0, %s53
      %s57 = sphi 0, %s56
      %s73 = sphi 0, %s57
      %s87 = sphi 0, %s89
      %s90 = sphi 0, %s87
      %s91 = sphi 0, %s90
      %s107 = sphi 0, %s91
      %s121 = sphi 0, %s123
      %s124 = sphi 0, %s121
      %s125 = sphi 0, %s124
      %s141 = sphi 0, %s125
      %s147 = sphi 0, %s149
      %s150 = sphi 0, %s147
      %s151 = sphi 0, %s150
      %s167 = sphi 0, %s151
      %s173 = sphi 0, %s175
      %s176 = sphi 0, %s173
      %s177 = sphi 0, %s176
      %s193 = sphi 0, %s177
    $region4: #{tpu_custom_call.1} parent=1 // loop_header_branch
      %26 = sbr.rel (%p24) target = $region8
    $region5: #{tpu_custom_call.1} parent=1 // loop_body
      %s28 = ssub.s32 %s23, 1
      %s29 = ssub.s32 %s23, 2
      %s36 = sadd.s32 1, %s31
      %p37 = scmp.ge.s32.totalorder %s36, 2
      %s38 = scalar_select %p37, 0, %s36
      %s39 = sadd.s32 1, %s30
      %s40 = scalar_select %p37, %s39, %s30
      %p41 = scmp.ge.s32.totalorder %s40, 2
      %s42 = scalar_select %p41, 0, %s40
      %s43 = smul.u32 %s30, 2
      %s44 = sadd.s32 %s43, %s31
      %p45 = scmp.lt.s32.totalorder %s44, 2
      %s46 = scalar_select %p45, %s44, 2
      %s47 = smul.u32 %s42, 2
      %s48 = sadd.s32 %s47, %s38
      %p49 = scmp.lt.s32.totalorder %s48, 2
      %s50 = scalar_select %p49, %s48, 2
      %s51 = ssub.s32 %s46, %s50
      %p52 = scmp.eq.s32.totalorder %s51, 0
      %s54 = sadd.s32 %s53, 1
      %s55 = scalar_select %p52, %s53, %s54
      %p58 = pneg %p52
      %p59 = scmp.eq.s32.totalorder %s23, 3
      %p60 = por %p58, %p59
      %p61 = scmp.ne.s32.totalorder %s53, %s56
      %p62 = scmp.eq.s32.totalorder %s23, 0
      %p63 = por %p61, %p62
      %p64 = scmp.ne.s32.totalorder %s53, %s56
      %p65 = scmp.eq.s32.totalorder %s28, 3
      %p66 = por %p64, %p65
      %p67 = scmp.ne.s32.totalorder %s56, %s57
      %p68 = scmp.eq.s32.totalorder %s28, 0
      %p69 = por %p67, %p68
      %p70 = scmp.ne.s32.totalorder %s56, %s57
      %p71 = scmp.eq.s32.totalorder %s29, 3
      %p72 = por %p70, %p71
      %p74 = scmp.ne.s32.totalorder %s57, %s73
      %p75 = scmp.eq.s32.totalorder %s29, 0
      %p76 = por %p74, %p75
      %s77 = smul.u32 %s30, 2
      %s78 = sadd.s32 %s77, %s31
      %p79 = scmp.lt.s32.totalorder %s78, 2
      %s80 = scalar_select %p79, %s78, 2
      %s81 = smul.u32 %s42, 2
      %s82 = sadd.s32 %s81, %s38
      %p83 = scmp.lt.s32.totalorder %s82, 2
      %s84 = scalar_select %p83, %s82, 2
      %s85 = ssub.s32 %s80, %s84
      %p86 = scmp.eq.s32.totalorder %s85, 0
      %s88 = sadd.s32 %s87, 1
      %s89 = scalar_select %p86, %s87, %s88
      %p92 = pneg %p86
      %p93 = scmp.eq.s32.totalorder %s23, 3
      %p94 = por %p92, %p93
      %p95 = scmp.ne.s32.totalorder %s87, %s90
      %p96 = scmp.eq.s32.totalorder %s23, 0
      %p97 = por %p95, %p96
      %p98 = scmp.ne.s32.totalorder %s87, %s90
      %p99 = scmp.eq.s32.totalorder %s28, 3
      %p100 = por %p98, %p99
      %p101 = scmp.ne.s32.totalorder %s90, %s91
      %p102 = scmp.eq.s32.totalorder %s28, 0
      %p103 = por %p101, %p102
      %p104 = scmp.ne.s32.totalorder %s90, %s91
      %p105 = scmp.eq.s32.totalorder %s29, 3
      %p106 = por %p104, %p105
      %p108 = scmp.ne.s32.totalorder %s91, %s107
      %p109 = scmp.eq.s32.totalorder %s29, 0
      %p110 = por %p108, %p109
      %s111 = smul.u32 %s30, 2
      %s112 = sadd.s32 %s111, %s31
      %p113 = scmp.lt.s32.totalorder %s112, 2
      %s114 = scalar_select %p113, %s112, 2
      %s115 = smul.u32 %s42, 2
      %s116 = sadd.s32 %s115, %s38
      %p117 = scmp.lt.s32.totalorder %s116, 2
      %s118 = scalar_select %p117, %s116, 2
      %s119 = ssub.s32 %s114, %s118
      %p120 = scmp.eq.s32.totalorder %s119, 0
      %s122 = sadd.s32 %s121, 1
      %s123 = scalar_select %p120, %s121, %s122
      %p126 = pneg %p120
      %p127 = scmp.eq.s32.totalorder %s23, 3
      %p128 = por %p126, %p127
      %p129 = scmp.ne.s32.totalorder %s121, %s124
      %p130 = scmp.eq.s32.totalorder %s23, 0
      %p131 = por %p129, %p130
      %p132 = scmp.ne.s32.totalorder %s121, %s124
      %p133 = scmp.eq.s32.totalorder %s28, 3
      %p134 = por %p132, %p133
      %p135 = scmp.ne.s32.totalorder %s124, %s125
      %p136 = scmp.eq.s32.totalorder %s28, 0
      %p137 = por %p135, %p136
      %p138 = scmp.ne.s32.totalorder %s124, %s125
      %p139 = scmp.eq.s32.totalorder %s29, 3
      %p140 = por %p138, %p139
      %p142 = scmp.ne.s32.totalorder %s125, %s141
      %p143 = scmp.eq.s32.totalorder %s29, 0
      %p144 = por %p142, %p143
      %s145 = ssub.s32 %s30, %s42
      %p146 = scmp.eq.s32.totalorder %s145, 0
      %s148 = sadd.s32 %s147, 1
      %s149 = scalar_select %p146, %s147, %s148
      %p152 = pneg %p146
      %p153 = scmp.eq.s32.totalorder %s23, 3
      %p154 = por %p152, %p153
      %p155 = scmp.ne.s32.totalorder %s147, %s150
      %p156 = scmp.eq.s32.totalorder %s23, 0
      %p157 = por %p155, %p156
      %p158 = scmp.ne.s32.totalorder %s147, %s150
      %p159 = scmp.eq.s32.totalorder %s28, 3
      %p160 = por %p158, %p159
      %p161 = scmp.ne.s32.totalorder %s150, %s151
      %p162 = scmp.eq.s32.totalorder %s28, 0
      %p163 = por %p161, %p162
      %p164 = scmp.ne.s32.totalorder %s150, %s151
      %p165 = scmp.eq.s32.totalorder %s29, 3
      %p166 = por %p164, %p165
      %p168 = scmp.ne.s32.totalorder %s151, %s167
      %p169 = scmp.eq.s32.totalorder %s29, 0
      %p170 = por %p168, %p169
      %s171 = ssub.s32 %s30, %s42
      %p172 = scmp.eq.s32.totalorder %s171, 0
      %s174 = sadd.s32 %s173, 1
      %s175 = scalar_select %p172, %s173, %s174
      %p178 = pneg %p172
      %p179 = scmp.eq.s32.totalorder %s23, 3
      %p180 = por %p178, %p179
      %p181 = scmp.ne.s32.totalorder %s173, %s176
      %p182 = scmp.eq.s32.totalorder %s23, 0
      %p183 = por %p181, %p182
      %p184 = scmp.ne.s32.totalorder %s173, %s176
      %p185 = scmp.eq.s32.totalorder %s28, 3
      %p186 = por %p184, %p185
      %p187 = scmp.ne.s32.totalorder %s176, %s177
      %p188 = scmp.eq.s32.totalorder %s28, 0
      %p189 = por %p187, %p188
      %p190 = scmp.ne.s32.totalorder %s176, %s177
      %p191 = scmp.eq.s32.totalorder %s29, 3
      %p192 = por %p190, %p191
      %p194 = scmp.ne.s32.totalorder %s177, %s193
      %p195 = scmp.eq.s32.totalorder %s29, 0
      %p196 = por %p194, %p195
      %p197 = scmp.le.s32.totalorder 1, %s23
      %p198 = scmp.lt.s32.totalorder %s23, 5
      %p199 = pnand %p197, %p198
      %p200 = pneg %p199
      // Predicated region
      $region9: #{tpu_custom_call.1} parent=5 // pred_check
        _
      $region10: #{tpu_custom_call.1} parent=5 // pred_check_branch
        %202 = sbr.rel (%p199) target = $region12
      $region11: #{tpu_custom_call.1} parent=5 // pred_region
        %s203 = ssub.s32 %s23, 1
      $region12: #{tpu_custom_call.1} parent=5 // pred_fallthru
        _
      %p204 = scmp.lt.s32.totalorder %s23, 4
      // Predicated region
      $region13: #{tpu_custom_call.1} parent=5 // pred_check
        %p205 = pneg %p204
      $region14: #{tpu_custom_call.1} parent=5 // pred_check_branch
        %207 = sbr.rel (%p205) target = $region16
      $region15: #{tpu_custom_call.1} parent=5 // pred_region
        // Predicated region
        $region17: #{tpu_custom_call.1} parent=15 // pred_check
          %p208 = pneg %p63
        $region18: #{tpu_custom_call.1} parent=15 // pred_check_branch
          %210 = sbr.rel (%p208) target = $region20
        $region19: #{tpu_custom_call.1} parent=15 // pred_region
          %s211 = sand.u32 %s53, 1
          %s212 = scalar_lea.sflag [#allocation5], %s211
          %s213 = sand.u32 %s53, 1
          %s214 = smul.addr %s213, 8
          %s215 = scalar_lea.vmem [#allocation4], %s214
          %s216 = smul.u32 %s30, 2
          %s217 = sadd.s32 %s216, %s31
          %p218 = scmp.lt.s32.totalorder %s217, 2
          %s219 = scalar_select %p218, %s217, 2
          %s221 = ssub.s32 128, 128
          %222 = vsyncadd %s212, %s221
          %s223 = smul.addr %s219, 128
          %s224 = scalar_lea.hbm %s0, %s223
          %s226 = sshll.u32 %s215, 4
          %s227 = int_to_ptr.vmem [resolvable:$true] %s226
          %229 = dma.hbm_to_vmem [thread:$0]  %s224, 128, %s227, %s212
        $region20: #{tpu_custom_call.1} parent=15 // pred_fallthru
          _
        // Predicated region
        $region21: #{tpu_custom_call.1} parent=15 // pred_check
          %p230 = pneg %p97
        $region22: #{tpu_custom_call.1} parent=15 // pred_check_branch
          %232 = sbr.rel (%p230) target = $region24
        $region23: #{tpu_custom_call.1} parent=15 // pred_region
          %s233 = sand.u32 %s23, 1
          %s234 = scalar_lea.sflag [#allocation8], %s233
          %s235 = sand.u32 %s87, 1
          %s236 = smul.addr %s235, 8
          %s237 = scalar_lea.vmem [#allocation7], %s236
          %s238 = smul.u32 %s30, 2
          %s239 = sadd.s32 %s238, %s31
          %p240 = scmp.lt.s32.totalorder %s239, 2
          %s241 = scalar_select %p240, %s239, 2
          %s243 = ssub.s32 128, 128
          %244 = vsyncadd %s234, %s243
          %s245 = smul.addr %s241, 128
          %s246 = scalar_lea.hbm %s1, %s245
          %s248 = sshll.u32 %s237, 4
          %s249 = int_to_ptr.vmem [resolvable:$true] %s248
          %251 = dma.hbm_to_vmem [thread:$0]  %s246, 128, %s249, %s234
        $region24: #{tpu_custom_call.1} parent=15 // pred_fallthru
          _
        // Predicated region
        $region25: #{tpu_custom_call.1} parent=15 // pred_check
          %p252 = pneg %p131
        $region26: #{tpu_custom_call.1} parent=15 // pred_check_branch
          %254 = sbr.rel (%p252) target = $region28
        $region27: #{tpu_custom_call.1} parent=15 // pred_region
          %s255 = sand.u32 %s23, 1
          %s256 = scalar_lea.sflag [#allocation8], %s255
          %s257 = sand.u32 %s121, 1
          %s258 = smul.addr %s257, 16
          %s259 = scalar_lea.vmem [#allocation9], %s258
          %s260 = smul.u32 %s30, 2
          %s261 = sadd.s32 %s260, %s31
          %p262 = scmp.lt.s32.totalorder %s261, 2
          %s263 = scalar_select %p262, %s261, 2
          %s265 = ssub.s32 256, 256
          %266 = vsyncadd %s256, %s265
          %s267 = smul.addr %s263, 2
          %s268 = smul.addr %s267, 128
          %s269 = scalar_lea.hbm %s2, %s268
          %s271 = sshll.u32 %s259, 4
          %s272 = int_to_ptr.vmem [resolvable:$true] %s271
          %274 = dma.hbm_to_vmem [thread:$0]  %s269, 256, %s272, %s256
        $region28: #{tpu_custom_call.1} parent=15 // pred_fallthru
          _
      $region16: #{tpu_custom_call.1} parent=5 // pred_fallthru
        _
      %p275 = scmp.le.s32.totalorder 1, %s23
      %p276 = scmp.lt.s32.totalorder %s23, 5
      %p277 = pnand %p275, %p276
      %p278 = pneg %p277
      // Predicated region
      $region29: #{tpu_custom_call.1} parent=5 // pred_check
        _
      $region30: #{tpu_custom_call.1} parent=5 // pred_check_branch
        %280 = sbr.rel (%p277) target = $region32
      $region31: #{tpu_custom_call.1} parent=5 // pred_region
        %s281 = ssub.s32 %s23, 1
        %s282 = sand.u32 %s56, 1
        %s283 = scalar_lea.sflag [#allocation5], %s282
        %s284 = sand.u32 %s56, 1
        %s285 = smul.addr %s284, 8
        %s286 = scalar_lea.vmem [#allocation4], %s285
        // Predicated region
        $region33: #{tpu_custom_call.1} parent=31 // pred_check
          %p287 = pneg %p69
        $region34: #{tpu_custom_call.1} parent=31 // pred_check_branch
          %289 = sbr.rel (%p287) target = $region36
        $region35: #{tpu_custom_call.1} parent=31 // pred_region
          %290 = dma.done %s283, 128
        $region36: #{tpu_custom_call.1} parent=31 // pred_fallthru
          _
        %s291 = sand.u32 %s28, 1
        %s292 = scalar_lea.sflag [#allocation8], %s291
        %s293 = sand.u32 %s90, 1
        %s294 = smul.addr %s293, 8
        %s295 = scalar_lea.vmem [#allocation7], %s294
        // Predicated region
        $region37: #{tpu_custom_call.1} parent=31 // pred_check
          %p296 = pneg %p103
        $region38: #{tpu_custom_call.1} parent=31 // pred_check_branch
          %298 = sbr.rel (%p296) target = $region40
        $region39: #{tpu_custom_call.1} parent=31 // pred_region
          %299 = dma.done %s292, 128
        $region40: #{tpu_custom_call.1} parent=31 // pred_fallthru
          _
        %s300 = sand.u32 %s28, 1
        %s301 = scalar_lea.sflag [#allocation8], %s300
        %s302 = sand.u32 %s124, 1
        %s303 = smul.addr %s302, 16
        %s304 = scalar_lea.vmem [#allocation9], %s303
        // Predicated region
        $region41: #{tpu_custom_call.1} parent=31 // pred_check
          %p305 = pneg %p137
        $region42: #{tpu_custom_call.1} parent=31 // pred_check_branch
          %307 = sbr.rel (%p305) target = $region44
        $region43: #{tpu_custom_call.1} parent=31 // pred_region
          %308 = dma.done %s301, 256
        $region44: #{tpu_custom_call.1} parent=31 // pred_fallthru
          _
        %s309 = sand.u32 %s56, 1
        %s310 = scalar_lea.sflag [#allocation5], %s309
        %s311 = sand.u32 %s56, 1
        %s312 = smul.addr %s311, 8
        %s313 = scalar_lea.vmem [#allocation4], %s312
        %p314 = pneg %p69
        %p315 = pneg %p66
        %s316 = sand.u32 %s28, 1
        %s317 = scalar_lea.sflag [#allocation8], %s316
        %s318 = sand.u32 %s90, 1
        %s319 = smul.addr %s318, 8
        %s320 = scalar_lea.vmem [#allocation7], %s319
        %p321 = pneg %p103
        %p322 = pneg %p100
        %s323 = sand.u32 %s28, 1
        %s324 = scalar_lea.sflag [#allocation8], %s323
        %s325 = sand.u32 %s124, 1
        %s326 = smul.addr %s325, 16
        %s327 = scalar_lea.vmem [#allocation9], %s326
        %p328 = pneg %p137
        %p329 = pneg %p134
        %p330 = pneg %p163
        %p331 = pneg %p160
        %s332 = sand.u32 %s150, 1
        %s333 = scalar_lea.sflag [#allocation6], %s332
        %s334 = sand.u32 %s150, 1
        %s335 = smul.addr %s334, 8
        %s336 = scalar_lea.vmem [#allocation10], %s335
        %p337 = pneg %p189
        %p338 = pneg %p186
        %s339 = sand.u32 %s176, 1
        %s340 = scalar_lea.sflag [#allocation12], %s339
        %s341 = sand.u32 %s176, 1
        %s342 = smul.addr %s341, 8
        %s343 = scalar_lea.vmem [#allocation11], %s342
        %s344 = smul.u32 %s32, 2
        %s345 = sadd.s32 %s344, %s33
        %p346 = scmp.lt.s32.totalorder %s345, 2
        %s347 = scalar_select %p346, %s345, 2
        %s348 = smul.u32 %s32, 2
        %s349 = sadd.s32 %s348, %s33
        %p350 = scmp.lt.s32.totalorder %s349, 2
        %s351 = scalar_select %p350, %s349, 2
        %s352 = smul.u32 %s32, 2
        %s353 = sadd.s32 %s352, %s33
        %p354 = scmp.lt.s32.totalorder %s353, 2
        %s355 = scalar_select %p354, %s353, 2
        %s356 = smul.u32 %s32, 2
        %s357 = sadd.s32 %s356, %s33
        %p358 = scmp.eq.s32.totalorder %s33, 0
        // Predicated region
        $region45: #{tpu_custom_call.1} parent=31 // pred_check
          %p359 = pneg %p358
        $region46: #{tpu_custom_call.1} parent=31 // pred_check_branch
          %361 = sbr.rel (%p359) target = $region48
        $region47: #{tpu_custom_call.1} parent=31 // pred_region
          %vm362 = vcmask 7168
          %363 = vst.msk [vmem:[#allocation2] sm:$0xff] %vm362, 0.0
          %364 = vst.msk [vmem:[#allocation3] sm:$0xff] %vm362, 0.0
        $region48: #{tpu_custom_call.1} parent=31 // pred_fallthru
          _
        %v365 = vld [vmem:[%s286] sm:$0xff]
        %v366 = vld [vmem:[%s295] sm:$0xff]
        %v367 = vld [vmem:[%s304] sm:$0xff]
        %v368 = vld [vmem:[%s304 + $0x8] sm:$0xff]
        %v369 = vsub.f32 %v365, %v366
        %v370 = vmul.f32 %v369, %v369
        %371 = vadd.xlane.f32.xlu0 %v370
        %v372 = vpop.xlane.xlu0 %371
        %v373 = vand.u32 2147483647, %v367
        %v374 = vand.u32 2147483647, %v368
        %v375 = vadd.f32 %v373, %v374
        %376 = vadd.xlane.f32.xlu0 %v375
        %v377 = vpop.xlane.xlu0 %376
        %v378 = vmul.f32 %v366, %v366
        %379 = vadd.xlane.f32.xlu0 %v378
        %v380 = vpop.xlane.xlu0 %379
        %s381 = sadd.s32 %s357, 1
        %s382 = smul.u32 %s381, 8
        %p383 = scmp.le.s32.totalorder %s382, 20
        // Predicated region
        $region49: #{tpu_custom_call.1} parent=31 // pred_check
          %p384 = pneg %p383
        $region50: #{tpu_custom_call.1} parent=31 // pred_check_branch
          %386 = sbr.rel (%p384) target = $region52
        $region51: #{tpu_custom_call.1} parent=31 // pred_region
          %v387 = vld [vmem:[#allocation2] sm:$0xff]
          %v388 = vadd.f32 %v387, %v372
          %vm389 = vcmask 7168
          %390 = vst.msk [vmem:[#allocation2] sm:$0xff] %vm389, %v388
          %v391 = vld [vmem:[#allocation3] sm:$0xff]
          %v392 = vrsqrt.pop %v380
          %v393 = vmul.f32 %v377, %v392
          %v394 = vadd.f32 %v391, %v393
          %395 = vst.msk [vmem:[#allocation3] sm:$0xff] %vm389, %v394
        $region52: #{tpu_custom_call.1} parent=31 // pred_fallthru
          _
        %p396 = scmp.gt.s32.totalorder %s382, 20
        // Predicated region
        $region53: #{tpu_custom_call.1} parent=31 // pred_check
          %p397 = pneg %p396
        $region54: #{tpu_custom_call.1} parent=31 // pred_check_branch
          %399 = sbr.rel (%p397) target = $region56
        $region55: #{tpu_custom_call.1} parent=31 // pred_region
          %v400 = vlaneseq
          %v401 = vshrl.u32 %v400, 7
          %s402 = smul.u32 %s357, 8
          %v403 = vstv %s402
          %v404 = vadd.s32 %v401, %v403
          %vm405 = vcmp.lt.s32.totalorder %v404, 20
          %v406 = vld [vmem:[#allocation2] sm:$0xff]
          %v407 = vsel %vm405, %v372, 0.0
          %v408 = vadd.f32 %v406, %v407
          %vm409 = vcmask 7168
          %410 = vst.msk [vmem:[#allocation2] sm:$0xff] %vm409, %v408
          %v411 = vsel %vm405, %v380, 1.0
          %v412 = vrsqrt.pop %v411
          %v413 = vld [vmem:[#allocation3] sm:$0xff]
          %v414 = vmul.f32 %v377, %v412
          %v415 = vsel %vm405, %v414, 0.0
          %v416 = vadd.f32 %v413, %v415
          %417 = vst.msk [vmem:[#allocation3] sm:$0xff] %vm409, %v416
        $region56: #{tpu_custom_call.1} parent=31 // pred_fallthru
          _
        %p418 = scmp.eq.s32.totalorder %s33, 1
        // Predicated region
        $region57: #{tpu_custom_call.1} parent=31 // pred_check
          %p419 = pneg %p418
        $region58: #{tpu_custom_call.1} parent=31 // pred_check_branch
          %421 = sbr.rel (%p419) target = $region60
        $region59: #{tpu_custom_call.1} parent=31 // pred_region
          %v422 = vld [vmem:[#allocation2] sm:$0xff]
          %vm423 = vcmask 7168
          %v424 = vsel %vm423, %v422, 0.0
          %425 = vadd.xlane.f32.xlu0 %v424
          %v426 = vpop.xlane.xlu0 %425
          %v427 = vrot.slane %v426, 4
          %v428 = vadd.f32 %v426, %v427
          %v429 = vrot.slane %v428, 2
          %v430 = vadd.f32 %v428, %v429
          %v431 = vrot.slane %v430, 1
          %v432 = vadd.f32 %v430, %v431
          %s433 = vtos %v432
          %v434 = vstv %s433
          %v435 = vadd.f32 %v434, 0.0
          %436 = vst [vmem:[%s336] sm:$0xff] %v435
          %v437 = vld [vmem:[#allocation3] sm:$0xff]
          %v438 = vsel %vm423, %v437, 0.0
          %439 = vadd.xlane.f32.xlu0 %v438
          %v440 = vpop.xlane.xlu0 %439
          %v441 = vrot.slane %v440, 4
          %v442 = vadd.f32 %v440, %v441
          %v443 = vrot.slane %v442, 2
          %v444 = vadd.f32 %v442, %v443
          %v445 = vrot.slane %v444, 1
          %v446 = vadd.f32 %v444, %v445
          %s447 = vtos %v446
          %v448 = vstv %s447
          %v449 = vadd.f32 %v448, 0.0
          %450 = vst [vmem:[%s343] sm:$0xff] %v449
        $region60: #{tpu_custom_call.1} parent=31 // pred_fallthru
          _
        %s451 = sand.u32 %s150, 1
        %s452 = scalar_lea.sflag [#allocation6], %s451
        %s453 = sand.u32 %s150, 1
        %s454 = smul.addr %s453, 8
        %s455 = scalar_lea.vmem [#allocation10], %s454
        %s456 = sand.u32 %s176, 1
        %s457 = scalar_lea.sflag [#allocation12], %s456
        %s458 = sand.u32 %s176, 1
        %s459 = smul.addr %s458, 8
        %s460 = scalar_lea.vmem [#allocation11], %s459
        // Predicated region
        $region61: #{tpu_custom_call.1} parent=31 // pred_check
          %p461 = pneg %p160
        $region62: #{tpu_custom_call.1} parent=31 // pred_check_branch
          %463 = sbr.rel (%p461) target = $region64
        $region63: #{tpu_custom_call.1} parent=31 // pred_region
          %s465 = ssub.s32 128, 128
          %466 = vsyncadd %s452, %s465
          %s467 = smul.addr %s32, 128
          %s468 = scalar_lea.hbm %s3, %s467
          %s470 = sshll.u32 %s455, 4
          %s471 = int_to_ptr.vmem [resolvable:$true] %s470
          %473 = dma.vmem_to_hbm [thread:$0]  %s471, 128, %s468, %s452
        $region64: #{tpu_custom_call.1} parent=31 // pred_fallthru
          _
        // Predicated region
        $region65: #{tpu_custom_call.1} parent=31 // pred_check
          %p474 = pneg %p186
        $region66: #{tpu_custom_call.1} parent=31 // pred_check_branch
          %476 = sbr.rel (%p474) target = $region68
        $region67: #{tpu_custom_call.1} parent=31 // pred_region
          %s478 = ssub.s32 128, 128
          %479 = vsyncadd %s457, %s478
          %s480 = smul.addr %s32, 128
          %s481 = scalar_lea.hbm %s4, %s480
          %s483 = sshll.u32 %s460, 4
          %s484 = int_to_ptr.vmem [resolvable:$true] %s483
          %486 = dma.vmem_to_hbm [thread:$0]  %s484, 128, %s481, %s457
        $region68: #{tpu_custom_call.1} parent=31 // pred_fallthru
          _
      $region32: #{tpu_custom_call.1} parent=5 // pred_fallthru
        _
      %p487 = scmp.le.s32.totalorder 2, %s23
      // Predicated region
      $region69: #{tpu_custom_call.1} parent=5 // pred_check
        %p488 = pneg %p487
      $region70: #{tpu_custom_call.1} parent=5 // pred_check_branch
        %490 = sbr.rel (%p488) target = $region72
      $region71: #{tpu_custom_call.1} parent=5 // pred_region
        %s491 = ssub.s32 %s23, 2
        // Predicated region
        $region73: #{tpu_custom_call.1} parent=71 // pred_check
          %p492 = pneg %p166
        $region74: #{tpu_custom_call.1} parent=71 // pred_check_branch
          %494 = sbr.rel (%p492) target = $region76
        $region75: #{tpu_custom_call.1} parent=71 // pred_region
          %s495 = sand.u32 %s151, 1
          %s496 = scalar_lea.sflag [#allocation6], %s495
          %s497 = sand.u32 %s151, 1
          %s498 = smul.addr %s497, 8
          %s499 = scalar_lea.vmem [#allocation10], %s498
          %500 = dma.done %s496, 128
        $region76: #{tpu_custom_call.1} parent=71 // pred_fallthru
          _
        // Predicated region
        $region77: #{tpu_custom_call.1} parent=71 // pred_check
          %p501 = pneg %p192
        $region78: #{tpu_custom_call.1} parent=71 // pred_check_branch
          %503 = sbr.rel (%p501) target = $region80
        $region79: #{tpu_custom_call.1} parent=71 // pred_region
          %s504 = sand.u32 %s177, 1
          %s505 = scalar_lea.sflag [#allocation12], %s504
          %s506 = sand.u32 %s177, 1
          %s507 = smul.addr %s506, 8
          %s508 = scalar_lea.vmem [#allocation11], %s507
          %509 = dma.done %s505, 128
        $region80: #{tpu_custom_call.1} parent=71 // pred_fallthru
          _
      $region72: #{tpu_custom_call.1} parent=5 // pred_fallthru
        _
    $region6: #{tpu_custom_call.1} parent=1 // loop_footer
      %s27 = sadd.s32 1, %s23
    $region7: #{tpu_custom_call.1} parent=1 // loop_footer_branch
      %22 = sbr.rel target = $region3
    $region8: #{tpu_custom_call.1} parent=1 // loop_exit
      _
    %510 = vsyncpa [#allocation5], 1
    %s511 = scalar_lea.sflag [#allocation5], 1
    %512 = vsyncpa %s511, 1
    %513 = vsyncpa [#allocation8], 1
    %s514 = scalar_lea.sflag [#allocation8], 1
    %515 = vsyncpa %s514, 1
    %516 = vsyncpa [#allocation6], 1
    %s517 = scalar_lea.sflag [#allocation6], 1
    %518 = vsyncpa %s517, 1
    %519 = vsyncpa [#allocation12], 1
    %s520 = scalar_lea.sflag [#allocation12], 1
    %521 = vsyncpa %s520, 1

</llo_original>
